<compile_context>
chip_gen: v5e
topology: v5e:2x2
jax: 0.10.0
libtpu: 0.0.40
codegen_flags: <defaults>
</compile_context>

<pallas_src>
import jax
import jax.numpy as jnp
from jax.experimental import pallas as pl
from jax.experimental.pallas import tpu as pltpu


def _round_up(x, m):
    return (x + m - 1) // m * m


def _vmem_limit_bytes():
    """Scoped-VMEM limit: ~half of physical VMEM, capped, with a safe fallback."""
    cap = None
    try:
        info = pltpu.get_tpu_info()
        for attr in ("vmem_capacity_bytes", "vmem_bytes", "vmem_size_bytes"):
            v = getattr(info, attr, None)
            if v:
                cap = int(v)
                break
    except Exception:
        cap = None
    if cap is None:
        cap = 64 * 1024 * 1024  # conservative: assume v7x (64 MiB / TensorCore)
    return min(cap // 2, 96 * 1024 * 1024)


def make_label_smoothing_loss(classes_target, classes, smoothing=0.0,
                              dist_dtype=jnp.float32):
    """Returns forward(pred, target) -> (loss_scalar, true_dist)."""
    assert classes != 10, "smoothing / (classes - 10) divides by zero when classes == 10"
    # NOTE: classes < 10 gives a negative smoothing fill; this matches the
    # reference PyTorch module, so it is allowed (but unusual).
    confidence = float(1.0 - smoothing)
    smooth_fill = float(smoothing / (classes - 10))
    D = classes_target + (classes - 10)

    vmem_limit = _vmem_limit_bytes()
    tile_budget = (vmem_limit * 3) // 4  # leave headroom inside the scoped limit

    def _pick_tb(B, in_itemsize):
        # Physical lane-padded width used for VMEM accounting.
        d_lane = max(128, _round_up(D, 128))
        # 2x double-buffered pred block + ~6 full-width f32/int32 temporaries
        # (x/shifted, exp, logp, iota, true_dist, product) + tiny target/row_loss.
        bytes_per_row = 2 * d_lane * in_itemsize + 6 * d_lane * 4 + 32
        tb = tile_budget // bytes_per_row
        tb = max(8, (tb // 8) * 8)
        tb = min(tb, 2048)
        # >= 2 grid steps when the batch allows it (keeps both v7x TCs busy).
        if B > 8:
            tb = min(tb, _round_up(pl.cdiv(B, 2), 8))
        tb = min(tb, _round_up(B, 8))
        return tb

    def forward(pred, target):
        B, d_in = pred.shape
        assert d_in == D, "pred width must equal classes_target + (classes - 10)"
        # TODO(synk): add a class-axis grid (two-pass / online-softmax) fallback
        # for very wide D where even a (8, D) slab + temporaries exceeds VMEM.

        TB = _pick_tb(B, jnp.dtype(pred.dtype).itemsize)
        grid = (pl.cdiv(B, TB),)

        target2d = target.reshape(B, 1).astype(jnp.int32)

        # -------- kernel 1: per-row smoothed NLL (reads pred, tiny write) ----
        def loss_kernel(pred_ref, target_ref, row_loss_ref):
            x = pred_ref[...].astype(jnp.float32)                    # (TB, D)

            # numerically stable log_softmax over the class (lane) axis
            m = jnp.max(x, axis=-1, keepdims=True)
            shifted = x - m
            lse = jnp.log(jnp.sum(jnp.exp(shifted), axis=-1, keepdims=True))
            logp = shifted - lse                                     # (TB, D)

            # Row-invariant smoothing mask, hoisted to a single (1, D) row.
            col_row = jax.lax.broadcasted_iota(jnp.int32, (1, x.shape[1]), 1)
            base = jnp.where(col_row >= classes_target,
                             jnp.float32(smooth_fill), jnp.float32(0.0))  # (1, D)

            # Only the target scatter runs at full (TB, D) width.
            col = jax.lax.broadcasted_iota(jnp.int32, x.shape, 1)    # (TB, D)
            tgt = target_ref[...]                                    # (TB, 1)
            true_dist = jnp.where(col == tgt, jnp.float32(confidence), base)

            row_loss_ref[...] = jnp.sum(-true_dist * logp, axis=-1, keepdims=True)

        row_loss = pl.pallas_call(
            loss_kernel,
            grid=grid,
            out_shape=jax.ShapeDtypeStruct((B, 1), jnp.float32),
            in_specs=[
                pl.BlockSpec((TB, D), lambda i: (i, 0)),
                pl.BlockSpec((TB, 1), lambda i: (i, 0)),
            ],
            out_specs=pl.BlockSpec((TB, 1), lambda i: (i, 0)),
            compiler_params=pltpu.CompilerParams(
                dimension_semantics=("parallel",),
                vmem_limit_bytes=vmem_limit,
            ),
        )(pred, target2d)

        # -------- kernel 2: true_dist (write-only, decoupled from softmax) ---
        def dist_kernel(target_ref, dist_ref):
            shape = dist_ref.shape                                   # (TB, D)
            col_row = jax.lax.broadcasted_iota(jnp.int32, (1, shape[1]), 1)
            base = jnp.where(col_row >= classes_target,
                             jnp.float32(smooth_fill), jnp.float32(0.0))
            col = jax.lax.broadcasted_iota(jnp.int32, shape, 1)
            tgt = target_ref[...]                                    # (TB, 1)
            dist_ref[...] = jnp.where(col == tgt, jnp.float32(confidence),
                                      base).astype(dist_ref.dtype)

        true_dist = pl.pallas_call(
            dist_kernel,
            grid=grid,
            out_shape=jax.ShapeDtypeStruct((B, D), dist_dtype),
            in_specs=[pl.BlockSpec((TB, 1), lambda i: (i, 0))],
            out_specs=pl.BlockSpec((TB, D), lambda i: (i, 0)),
            compiler_params=pltpu.CompilerParams(
                dimension_semantics=("parallel",),
                vmem_limit_bytes=vmem_limit,
            ),
        )(target2d)

        # tiny wrapper-side reduction: mean over the batch (no slicing needed)
        loss = jnp.sum(row_loss[:, 0]) / jnp.float32(B)
        return loss, true_dist

    return forward


def _reference(pred, target, classes_target, classes, smoothing):
    # pure-JAX reference for a sanity check
    confidence = 1.0 - smoothing
    B, D = pred.shape
    logp = jax.nn.log_softmax(pred.astype(jnp.float32), axis=-1)
    col = jnp.arange(D)[None, :]
    base = jnp.where(col >= classes_target, smoothing / (classes - 10), 0.0)
    base = jnp.broadcast_to(base, (B, D)).astype(jnp.float32)
    true_dist = jnp.where(col == target[:, None], confidence, base)
    loss = jnp.mean(jnp.sum(-true_dist * logp, axis=-1))
    return loss, true_dist


if __name__ == "__main__":
    # small, module-consistent shapes
    B = 8
    classes_target = 16
    classes = 26            # -> extra width = classes - 10 = 16
    smoothing = 0.1
    D = classes_target + (classes - 10)   # 32 (class axis handled unpadded)

    key = jax.random.PRNGKey(0)
    kp, kt = jax.random.split(key)
    pred = jax.random.normal(kp, (B, D), dtype=jnp.float32)
    target = jax.random.randint(kt, (B,), 0, D, dtype=jnp.int32)

    fwd = make_label_smoothing_loss(classes_target, classes, smoothing)
    loss, true_dist = fwd(pred, target)
    jax.block_until_ready((loss, true_dist))

    ref_loss, ref_dist = _reference(pred, target, classes_target, classes, smoothing)
    assert jnp.allclose(loss, ref_loss, atol=1e-5), (loss, ref_loss)
    assert jnp.allclose(true_dist, ref_dist, atol=1e-6)

    print("KERNEL_OK")
</pallas_src>

<mosaic_0001>
module attributes {stable_mosaic.version = 11 : i64} {
  func.func @loss_kernel(%arg0: i32, %arg1: memref<8x32xf32, #tpu.memory_space<vmem>>, %arg2: memref<8x1xi32, #tpu.memory_space<vmem>>, %arg3: memref<8x1xf32, #tpu.memory_space<vmem>>) attributes {dimension_semantics = [#tpu.dimension_semantics<parallel>], iteration_bounds = array<i64: 1>, scalar_prefetch = 0 : i64, scratch_operands = 0 : i64, tpu.core_type = #tpu.core_type<tc>, window_params = [{transform_indices = @transform_0, window_bounds = array<i64: 8, 32>}, {transform_indices = @transform_1, window_bounds = array<i64: 8, 1>}, {transform_indices = @transform_2, window_bounds = array<i64: 8, 1>}]} {
    %c0 = arith.constant 0 : index
    %c0_0 = arith.constant 0 : index
    %0 = vector.load %arg1[%c0, %c0_0] : memref<8x32xf32, #tpu.memory_space<vmem>>, vector<8x32xf32>
    %cst = arith.constant dense<0xFF800000> : vector<8xf32>
    %1 = vector.multi_reduction <maximumf>, %0, %cst [1] : vector<8x32xf32> to vector<8xf32>
    %2 = vector.shape_cast %1 : vector<8xf32> to vector<8x1xf32>
    %3 = vector.broadcast %2 : vector<8x1xf32> to vector<8x32xf32>
    %4 = arith.subf %0, %3 : vector<8x32xf32>
    %5 = math.exp %4 : vector<8x32xf32>
    %cst_1 = arith.constant dense<0.000000e+00> : vector<8xf32>
    %6 = vector.multi_reduction <add>, %5, %cst_1 [1] : vector<8x32xf32> to vector<8xf32>
    %7 = vector.shape_cast %6 : vector<8xf32> to vector<8x1xf32>
    %8 = math.log %7 : vector<8x1xf32>
    %9 = vector.broadcast %8 : vector<8x1xf32> to vector<8x32xf32>
    %10 = arith.subf %4, %9 : vector<8x32xf32>
    %11 = tpu.iota {dimensions = array<i32: 1>} : vector<1x32xi32>
    %c16_i32 = arith.constant 16 : i32
    %12 = vector.broadcast %c16_i32 : i32 to vector<1x32xi32>
    %13 = arith.cmpi sge, %11, %12 : vector<1x32xi32>
    %cst_2 = arith.constant 6.250000e-03 : f32
    %cst_3 = arith.constant 0.000000e+00 : f32
    %14 = vector.broadcast %cst_2 : f32 to vector<1x32xf32>
    %15 = vector.broadcast %cst_3 : f32 to vector<1x32xf32>
    %16 = arith.select %13, %14, %15 : vector<1x32xi1>, vector<1x32xf32>
    %17 = tpu.iota {dimensions = array<i32: 1>} : vector<8x32xi32>
    %c0_4 = arith.constant 0 : index
    %c0_5 = arith.constant 0 : index
    %18 = vector.load %arg2[%c0_4, %c0_5] : memref<8x1xi32, #tpu.memory_space<vmem>>, vector<8x1xi32>
    %19 = vector.broadcast %18 : vector<8x1xi32> to vector<8x32xi32>
    %20 = arith.cmpi eq, %17, %19 : vector<8x32xi32>
    %cst_6 = arith.constant 0.899999976 : f32
    %21 = vector.broadcast %cst_6 : f32 to vector<8x32xf32>
    %22 = vector.shape_cast %16 : vector<1x32xf32> to vector<1x32xf32>
    %23 = vector.broadcast %22 : vector<1x32xf32> to vector<8x32xf32>
    %24 = arith.select %20, %21, %23 : vector<8x32xi1>, vector<8x32xf32>
    %cst_7 = arith.constant 0.000000e+00 : f32
    %25 = vector.broadcast %cst_7 : f32 to vector<8x32xf32>
    %26 = arith.subf %25, %24 : vector<8x32xf32>
    %27 = arith.mulf %26, %10 : vector<8x32xf32>
    %cst_8 = arith.constant dense<0.000000e+00> : vector<8xf32>
    %28 = vector.multi_reduction <add>, %27, %cst_8 [1] : vector<8x32xf32> to vector<8xf32>
    %29 = vector.shape_cast %28 : vector<8xf32> to vector<8x1xf32>
    %c0_9 = arith.constant 0 : index
    %c0_10 = arith.constant 0 : index
    %30 = vector.load %arg3[%c0_9, %c0_10] : memref<8x1xf32, #tpu.memory_space<vmem>>, vector<8x1xf32>
    tpu.vector_store %arg3[%c0_9, %c0_10], %29 {strides = array<i32>} : memref<8x1xf32, #tpu.memory_space<vmem>>, vector<8x1xf32>,
    return
  }
  func.func @transform_0(%arg0: i32) -> (i32, i32) {
    %c0_i32 = arith.constant 0 : i32
    %c0_i32_0 = arith.constant 0 : i32
    return %arg0, %c0_i32 : i32, i32
  }
  func.func @transform_1(%arg0: i32) -> (i32, i32) {
    %c0_i32 = arith.constant 0 : i32
    %c0_i32_0 = arith.constant 0 : i32
    return %arg0, %c0_i32 : i32, i32
  }
  func.func @transform_2(%arg0: i32) -> (i32, i32) {
    %c0_i32 = arith.constant 0 : i32
    %c0_i32_0 = arith.constant 0 : i32
    return %arg0, %c0_i32 : i32, i32
  }
}

</mosaic_0001>

<llo_original>
// kernel: tpu_custom_call.1
$region0: #{tpu_custom_call.1}
  #allocation0 [shape = 'u32[]', space=smem, size = 0x4, offset = 0x4, fixed_abs, tag = 'smem constant byte address 0x4 - core index']
  #allocation1 [shape = 'u32[72,128]{1,0:T(1,128)}', space=vmem, size = 0x9000, scoped, tag = 'internal scratch']
  %s0 = inlined_call_operand.vmem [shape: f32[8,32], index: 0, kind: input, shape index: {}]
  %s1 = inlined_call_operand.vmem [shape: s32[8,1], index: 1, kind: input, shape index: {}]
  %s2 = inlined_call_operand.vmem [shape: f32[8,1], index: 2, kind: output, shape index: {}]
  %s3 = sld [smem:[#allocation0]]
  $region18: #{tpu_custom_call.1} parent=0
    _
  %s5 = ssub.s32 1, %s3
  %s6 = scalar_select 0, %s5, %s3
  // Predicated region
  $region2: #{tpu_custom_call.1} parent=0 // pred_check
    _
  $region3: #{tpu_custom_call.1} parent=0 // pred_check_branch
    %8 = sbr.rel (0) target = $region5
  $region4: #{tpu_custom_call.1} parent=0 // pred_region
    _
  $region5: #{tpu_custom_call.1} parent=0 // pred_fallthru
    _
  // Predicated region
  $region6: #{tpu_custom_call.1} parent=0 // pred_check
    _
  $region7: #{tpu_custom_call.1} parent=0 // pred_check_branch
    %10 = sbr.rel (0) target = $region9
  $region8: #{tpu_custom_call.1} parent=0 // pred_region
    _
  $region9: #{tpu_custom_call.1} parent=0 // pred_fallthru
    _
  %v11 = vld [vmem:[%s0] sm:$0xff]
  %vm12 = vcmask 261120
  %v13 = vsel %vm12, %v11, -inf
  %14 = vmax.xlane.f32.xlu0 %v13
  %v15 = vpop.xlane.xlu0 %14
  %v16 = vsub.f32 %v11, %v15
  %v17 = vmul.f32 %v16, 1.442695
  %v18 = vpow.pop %v17
  %v19 = vsel %vm12, %v18, 0.0
  %20 = vadd.xlane.f32.xlu0 %v19
  %v21 = vpop.xlane.xlu0 %20
  %v22 = vlog2.pop %v21
  %v23 = vmul.f32 %v22, 0.6931472
  %v24 = vsub.f32 %v16, %v23
  %v25 = vlaneseq
  %v26 = vand.u32 %v25, 127
  %vm27 = vcmp.ge.s32.totalorder %v26, 16
  %v28 = vsel %vm27, 0.00625, 0.0
  %v29 = vld [vmem:[%s1] sm:$0xff]
  %30 = vset.pattern.permute.xlu0 0
  %31 = vperm.xlu0 %30, %v29
  %v32 = vpop.permute.xlu0 %31
  %vm33 = vcmp.eq.s32.totalorder %v26, %v32
  %v34 = vsel %vm33, 0.9, %v28
  %v35 = vsub.f32 0.0, %v34
  %v36 = vmul.f32 %v35, %v24
  %v37 = vsel %vm12, %v36, 0.0
  %38 = vadd.xlane.f32.xlu0 %v37
  %v39 = vpop.xlane.xlu0 %38
  %vm40 = vcmask 7168
  %41 = vst.msk [vmem:[%s2] sm:$0xff] %vm40, %v39
  // Predicated region
  $region10: #{tpu_custom_call.1} parent=0 // pred_check
    _
  $region11: #{tpu_custom_call.1} parent=0 // pred_check_branch
    %43 = sbr.rel (0) target = $region13
  $region12: #{tpu_custom_call.1} parent=0 // pred_region
    _
  $region13: #{tpu_custom_call.1} parent=0 // pred_fallthru
    _
  // Predicated region
  $region14: #{tpu_custom_call.1} parent=0 // pred_check
    _
  $region15: #{tpu_custom_call.1} parent=0 // pred_check_branch
    %45 = sbr.rel (0) target = $region17
  $region16: #{tpu_custom_call.1} parent=0 // pred_region
    _
  $region17: #{tpu_custom_call.1} parent=0 // pred_fallthru
    _

</llo_original>
